<compile_context>
chip_gen: v5e
topology: v5e:2x2
jax: 0.10.0
libtpu: 0.0.40
codegen_flags: <defaults>
</compile_context>

<pallas_src>
import functools

import numpy as np
import jax
import jax.numpy as jnp
from jax import lax
from jax.experimental import pallas as pl
from jax.experimental.pallas import tpu as pltpu


# ----------------------- Voxelizer configuration -----------------------------
X_MIN, X_MAX = 0.0, 8.0     # "forward"
Y_MIN, Y_MAX = -4.0, 4.0    # "sideways"
Z_MIN, Z_MAX = 0.0, 2.0     # "up"
STEP = 0.5

D = int((Z_MAX - Z_MIN) / STEP)   # 4   (depth,  z axis)
H = int((Y_MAX - Y_MIN) / STEP)   # 16  (height, y axis)
W = int((X_MAX - X_MIN) / STEP)   # 16  (width,  x axis)
HW = H * W                        # 256 (lane-dense output)
D_PAD = 8                         # pad z one-hot to a full sublane group


def _round_up(x, m):
    return ((x + m - 1) // m) * m


def _default_operand_dtype():
    # int8 MXU path on v5e/v6e (lossless for 0/1 one-hots, ~2x bf16 throughput,
    # half the operand footprint); bf16 everywhere else (v7x MXU has no integer
    # path).  TODO(synk): fp8 (e4m3) one-hots on v7x would regain the 2x
    # packing there as well.
    try:
        kind = jax.devices()[0].device_kind.lower()
    except Exception:
        kind = ""
    if ("v5" in kind) or ("v6" in kind):
        return jnp.int8
    return jnp.bfloat16


# ------------------------------ Pallas kernel --------------------------------
def _voxelizer_kernel(pc_ref, out_ref, acc_ref, *, tn, nt_per_split,
                      num_valid, n_padded, op_dtype):
    # pc_ref : (1, 3, tn) f32 block   (coords on sublanes, points on lanes)
    # out_ref: (1, 1, D, HW) f32 block (resident across the point-tile axis)
    # acc_ref: (HW, D_PAD) VMEM scratch accumulator (f32 or i32)
    k = pl.program_id(2)

    @pl.when(k == 0)
    def _init():
        acc_ref[...] = jnp.zeros_like(acc_ref)

    pc = pc_ref[0]                           # (3, tn) f32
    x = pc[0:1, :]                           # (1, tn) lane-dense rows
    y = pc[1:2, :]
    z = pc[2:3, :]

    # Voxel indices -- exact subtraction form of the reference module.
    bev_x = jnp.clip(jnp.floor((x - X_MIN) / STEP), 0.0, W - 1.0)
    bev_y = jnp.clip(jnp.floor((Y_MAX - y) / STEP), 0.0, H - 1.0)
    bev_z = jnp.clip(jnp.floor((z - Z_MIN) / STEP), 0.0, D - 1.0)

    # In-bounds mask on raw x / y (z is clamped, never masked) -- identical
    # comparisons to the PyTorch module.  NaN x/y drop the point; NaN z with
    # in-bounds x/y is undefined exactly like the numpy/PyTorch reference.
    valid = (x >= X_MIN) & (x <= X_MAX) & (y >= Y_MIN) & (y <= Y_MAX)  # (1, tn)

    # Mask points added by padding N up to a tile multiple (static no-op when
    # there is no padding and num_valid == N).
    if num_valid < n_padded:
        start = (pl.program_id(1) * nt_per_split + k) * tn
        pidx = start + lax.broadcasted_iota(jnp.int32, (1, tn), 1)
        valid = valid & (pidx < num_valid)

    # Combined (y*W + x) index; invalid points get -1 so no one-hot row fires.
    bev_yx = (bev_y * float(W) + bev_x).astype(jnp.int32)          # (1, tn)
    bev_yx = jnp.where(valid, bev_yx, -1)
    bev_zi = bev_z.astype(jnp.int32)                               # (1, tn)

    # Big yx one-hot directly in (HW, tn) orientation -> streamed MXU LHS with
    # M = HW = 256 rows; tiny z one-hot is the latched (tn, 8) weight.  Both
    # are exactly 0/1, so int8 / bf16 operands are lossless with i32 / f32
    # accumulation.
    m = (lax.broadcasted_iota(jnp.int32, (HW, tn), 0) == bev_yx).astype(op_dtype)
    ohz = (lax.broadcasted_iota(jnp.int32, (D_PAD, tn), 0) == bev_zi)
    ohz_t = jnp.transpose(ohz.astype(jnp.float32), (1, 0)).astype(op_dtype)  # (tn, 8)

    counts = lax.dot_general(
        m, ohz_t, (((1,), (0,)), ((), ())),
        preferred_element_type=acc_ref.dtype)                      # (HW, D_PAD)
    acc_ref[...] += counts

    @pl.when(k == pl.num_programs(2) - 1)
    def _finalize():
        occ = (acc_ref[...] > 0).astype(jnp.float32)               # (HW, D_PAD)
        out_ref[0, 0] = jnp.transpose(occ, (1, 0))[:D, :]          # (D, HW)


# ------------------------------ wrapper ---------------------------------------
def voxelize(pointclouds, *, num_valid=None, tile_n=4096, num_splits=None,
             operand_dtype=None):
    """pointclouds: [B, N, 3] float32 (stacked, equal-length / zero-padded clouds).

    Returns [B, D, H, W] float32 occupancy grid (same semantics as the PyTorch
    Voxelizer.forward on a list of [N, 3] clouds).

    tile_n:     points per grid step (sweepable; 4096-8192 amortizes the
                ~0.35us per-step overhead at realistic lidar sizes).
    num_splits: extra "parallel" grid axis splitting the point loop so both
                v7x TensorCores get work even at batch=1 (default 2 iff B==1).
    """
    # TODO(synk): truly ragged per-cloud point counts (PyTorch takes a python
    # list) would need per-batch lengths via scalar prefetch; here all clouds
    # share one valid length `num_valid` (default N) and padding is masked.
    b, n, c = pointclouds.shape
    assert c == 3
    if num_valid is None:
        num_valid = n
    num_valid = int(num_valid)
    if operand_dtype is None:
        operand_dtype = _default_operand_dtype()

    tn = min(_round_up(int(tile_n), 128), _round_up(max(n, 1), 128))
    nt_total = (max(n, 1) + tn - 1) // tn
    if num_splits is None:
        num_splits = 2 if b == 1 else 1
    splits = max(1, min(int(num_splits), nt_total))
    n_pad = _round_up(max(n, 1), tn * splits)
    nt_per_split = n_pad // (tn * splits)

    # Wrapper-side re-layout so points are on lanes inside the kernel.
    pts = jnp.transpose(jnp.asarray(pointclouds, jnp.float32), (0, 2, 1))  # [B,3,N]
    if n_pad != n:
        pts = jnp.pad(pts, ((0, 0), (0, 0), (0, n_pad - n)))

    def _call(op_dtype):
        acc_dtype = (jnp.int32 if np.dtype(op_dtype) == np.dtype(jnp.int8)
                     else jnp.float32)
        kernel = functools.partial(
            _voxelizer_kernel, tn=tn, nt_per_split=nt_per_split,
            num_valid=num_valid, n_padded=n_pad, op_dtype=op_dtype)
        return pl.pallas_call(
            kernel,
            out_shape=jax.ShapeDtypeStruct((b, splits, D, HW), jnp.float32),
            grid_spec=pltpu.PrefetchScalarGridSpec(
                num_scalar_prefetch=0,
                grid=(b, splits, nt_per_split),
                in_specs=[pl.BlockSpec(
                    (1, 3, tn), lambda i, s, k: (i, 0, s * nt_per_split + k))],
                out_specs=pl.BlockSpec(
                    (1, 1, D, HW), lambda i, s, k: (i, s, 0, 0)),
                scratch_shapes=[pltpu.VMEM((HW, D_PAD), acc_dtype)],
            ),
            compiler_params=pltpu.CompilerParams(
                dimension_semantics=("parallel", "parallel", "arbitrary"),
                vmem_limit_bytes=32 * 1024 * 1024,
            ),
        )(pts)

    try:
        out = _call(operand_dtype)
    except Exception:
        if np.dtype(operand_dtype) == np.dtype(jnp.bfloat16):
            raise
        out = _call(jnp.bfloat16)   # bf16 one-hots are always lossless

    # OR the per-split occupancy slabs and restore [B, D, H, W].
    return jnp.max(out, axis=1).reshape(b, D, H, W)


# ------------------------------ numpy reference -------------------------------
def voxelize_ref(pointclouds):
    pc = np.asarray(pointclouds, np.float32)
    b, n, _ = pc.shape
    out = np.zeros((b, D, H, W), np.float32)
    for i in range(b):
        x, y, z = pc[i, :, 0], pc[i, :, 1], pc[i, :, 2]
        bx = np.clip(np.floor((x - X_MIN) / STEP), 0, W - 1).astype(np.int64)
        by = np.clip(np.floor((Y_MAX - y) / STEP), 0, H - 1).astype(np.int64)
        bz = np.clip(np.floor((z - Z_MIN) / STEP), 0, D - 1).astype(np.int64)
        m = (x >= X_MIN) & (x <= X_MAX) & (y >= Y_MIN) & (y <= Y_MAX)
        out[i, bz[m], by[m], bx[m]] = 1.0
    return out


if __name__ == "__main__":
    key = jax.random.PRNGKey(0)

    def make_cloud(k, b, n):
        kx, ky, kz = jax.random.split(k, 3)
        # Sample slightly outside the x/y ranges (exercises the in-bounds mask)
        # and outside the z range (exercises the clamp).
        x = jax.random.uniform(kx, (b, n), minval=X_MIN - 1.0, maxval=X_MAX + 1.0)
        y = jax.random.uniform(ky, (b, n), minval=Y_MIN - 1.0, maxval=Y_MAX + 1.0)
        z = jax.random.uniform(kz, (b, n), minval=Z_MIN - 0.5, maxval=Z_MAX + 0.5)
        return jnp.stack([x, y, z], axis=-1)          # [B, N, 3]

    k1, k2, k3 = jax.random.split(key, 3)

    # Case 1: N not a multiple of the tile -> zero-padding + padded-point mask.
    pc1 = make_cloud(k1, 2, 200)
    bev1 = jax.block_until_ready(voxelize(pc1))
    assert bev1.shape == (2, D, H, W) and bev1.dtype == jnp.float32
    np.testing.assert_array_equal(np.asarray(bev1), voxelize_ref(np.asarray(pc1)))

    # Case 2: several point tiles -> VMEM accumulator across the point axis.
    pc2 = make_cloud(k2, 2, 1024)
    bev2 = jax.block_until_ready(voxelize(pc2, tile_n=256))
    np.testing.assert_array_equal(np.asarray(bev2), voxelize_ref(np.asarray(pc2)))

    # Case 3: batch=1 with the point loop split across two "parallel" slabs
    # (the v7x two-TensorCore path); explicitly exercises the bf16 operands.
    pc3 = make_cloud(k3, 1, 300)
    bev3 = jax.block_until_ready(
        voxelize(pc3, tile_n=128, num_splits=2, operand_dtype=jnp.bfloat16))
    np.testing.assert_array_equal(np.asarray(bev3), voxelize_ref(np.asarray(pc3)))

    print("KERNEL_OK")
</pallas_src>

<mosaic_0001>
module attributes {stable_mosaic.version = 11 : i64} {
  func.func @_voxelizer_kernel(%arg0: i32, %arg1: i32, %arg2: i32, %arg3: memref<1x3x256xf32, #tpu.memory_space<vmem>>, %arg4: memref<1x1x4x256xf32, #tpu.memory_space<vmem>>, %arg5: memref<256x8xf32, #tpu.memory_space<vmem>>) attributes {dimension_semantics = [#tpu.dimension_semantics<parallel>, #tpu.dimension_semantics<parallel>, #tpu.dimension_semantics<arbitrary>], iteration_bounds = array<i64: 2, 1, 1>, scalar_prefetch = 0 : i64, scratch_operands = 1 : i64, tpu.core_type = #tpu.core_type<tc>, window_params = [{transform_indices = @transform_0, window_bounds = array<i64: 1, 3, 256>}, {transform_indices = @transform_1, window_bounds = array<i64: 1, 1, 4, 256>}]} {
    %c0_i32 = arith.constant 0 : i32
    %0 = arith.cmpi eq, %arg2, %c0_i32 : i32
    %1 = arith.extui %0 : i1 to i32
    %c0_i32_0 = arith.constant 0 : i32
    %2 = arith.cmpi ne, %1, %c0_i32_0 : i32
    scf.if %2 {
      %cst_26 = arith.constant 0.000000e+00 : f32
      %82 = vector.broadcast %cst_26 : f32 to vector<256x8xf32>
      %c0_27 = arith.constant 0 : index
      %c0_28 = arith.constant 0 : index
      %83 = vector.load %arg5[%c0_27, %c0_28] : memref<256x8xf32, #tpu.memory_space<vmem>>, vector<256x8xf32>
      tpu.vector_store %arg5[%c0_27, %c0_28], %82 {strides = array<i32>} : memref<256x8xf32, #tpu.memory_space<vmem>>, vector<256x8xf32>,
    } else {
    }
    %c0 = arith.constant 0 : index
    %c0_1 = arith.constant 0 : index
    %c0_2 = arith.constant 0 : index
    %3 = vector.load %arg3[%c0, %c0_1, %c0_2] : memref<1x3x256xf32, #tpu.memory_space<vmem>>, vector<1x3x256xf32>
    %4 = vector.shape_cast %3 : vector<1x3x256xf32> to vector<3x256xf32>
    %5 = vector.extract_strided_slice %4 {offsets = [0, 0], sizes = [1, 256], strides = [1, 1]} : vector<3x256xf32> to vector<1x256xf32>
    %6 = vector.extract_strided_slice %4 {offsets = [1, 0], sizes = [1, 256], strides = [1, 1]} : vector<3x256xf32> to vector<1x256xf32>
    %7 = vector.extract_strided_slice %4 {offsets = [2, 0], sizes = [1, 256], strides = [1, 1]} : vector<3x256xf32> to vector<1x256xf32>
    %cst = arith.constant 0.000000e+00 : f32
    %8 = vector.broadcast %cst : f32 to vector<1x256xf32>
    %9 = arith.subf %5, %8 : vector<1x256xf32>
    %cst_3 = arith.constant 5.000000e-01 : f32
    %10 = vector.broadcast %cst_3 : f32 to vector<1x256xf32>
    %11 = arith.divf %9, %10 : vector<1x256xf32>
    %12 = math.floor %11 : vector<1x256xf32>
    %cst_4 = arith.constant 0.000000e+00 : f32
    %cst_5 = arith.constant 1.500000e+01 : f32
    %13 = vector.broadcast %cst_4 : f32 to vector<1x256xf32>
    %14 = arith.maximumf %13, %12 : vector<1x256xf32>
    %15 = vector.broadcast %cst_5 : f32 to vector<1x256xf32>
    %16 = arith.minimumf %15, %14 : vector<1x256xf32>
    %cst_6 = arith.constant 4.000000e+00 : f32
    %17 = vector.broadcast %cst_6 : f32 to vector<1x256xf32>
    %18 = arith.subf %17, %6 : vector<1x256xf32>
    %cst_7 = arith.constant 5.000000e-01 : f32
    %19 = vector.broadcast %cst_7 : f32 to vector<1x256xf32>
    %20 = arith.divf %18, %19 : vector<1x256xf32>
    %21 = math.floor %20 : vector<1x256xf32>
    %cst_8 = arith.constant 0.000000e+00 : f32
    %cst_9 = arith.constant 1.500000e+01 : f32
    %22 = vector.broadcast %cst_8 : f32 to vector<1x256xf32>
    %23 = arith.maximumf %22, %21 : vector<1x256xf32>
    %24 = vector.broadcast %cst_9 : f32 to vector<1x256xf32>
    %25 = arith.minimumf %24, %23 : vector<1x256xf32>
    %cst_10 = arith.constant 0.000000e+00 : f32
    %26 = vector.broadcast %cst_10 : f32 to vector<1x256xf32>
    %27 = arith.subf %7, %26 : vector<1x256xf32>
    %cst_11 = arith.constant 5.000000e-01 : f32
    %28 = vector.broadcast %cst_11 : f32 to vector<1x256xf32>
    %29 = arith.divf %27, %28 : vector<1x256xf32>
    %30 = math.floor %29 : vector<1x256xf32>
    %cst_12 = arith.constant 0.000000e+00 : f32
    %cst_13 = arith.constant 3.000000e+00 : f32
    %31 = vector.broadcast %cst_12 : f32 to vector<1x256xf32>
    %32 = arith.maximumf %31, %30 : vector<1x256xf32>
    %33 = vector.broadcast %cst_13 : f32 to vector<1x256xf32>
    %34 = arith.minimumf %33, %32 : vector<1x256xf32>
    %cst_14 = arith.constant 0.000000e+00 : f32
    %35 = vector.broadcast %cst_14 : f32 to vector<1x256xf32>
    %36 = arith.cmpf oge, %5, %35 : vector<1x256xf32>
    %cst_15 = arith.constant 8.000000e+00 : f32
    %37 = vector.broadcast %cst_15 : f32 to vector<1x256xf32>
    %38 = arith.cmpf ole, %5, %37 : vector<1x256xf32>
    %39 = arith.andi %36, %38 : vector<1x256xi1>
    %cst_16 = arith.constant -4.000000e+00 : f32
    %40 = vector.broadcast %cst_16 : f32 to vector<1x256xf32>
    %41 = arith.cmpf oge, %6, %40 : vector<1x256xf32>
    %42 = arith.andi %39, %41 : vector<1x256xi1>
    %cst_17 = arith.constant 4.000000e+00 : f32
    %43 = vector.broadcast %cst_17 : f32 to vector<1x256xf32>
    %44 = arith.cmpf ole, %6, %43 : vector<1x256xf32>
    %45 = arith.andi %42, %44 : vector<1x256xi1>
    %c1_i32 = arith.constant 1 : i32
    %46 = arith.muli %arg1, %c1_i32 : i32
    %47 = arith.addi %46, %arg2 : i32
    %c256_i32 = arith.constant 256 : i32
    %48 = arith.muli %47, %c256_i32 : i32
    %49 = tpu.iota {dimensions = array<i32: 1>} : vector<1x256xi32>
    %50 = vector.broadcast %48 : i32 to vector<1x256xi32>
    %51 = arith.addi %50, %49 : vector<1x256xi32>
    %c200_i32 = arith.constant 200 : i32
    %52 = vector.broadcast %c200_i32 : i32 to vector<1x256xi32>
    %53 = arith.cmpi slt, %51, %52 : vector<1x256xi32>
    %54 = arith.andi %45, %53 : vector<1x256xi1>
    %cst_18 = arith.constant 1.600000e+01 : f32
    %55 = vector.broadcast %cst_18 : f32 to vector<1x256xf32>
    %56 = arith.mulf %25, %55 : vector<1x256xf32>
    %57 = arith.addf %56, %16 : vector<1x256xf32>
    %58 = arith.fptosi %57 : vector<1x256xf32> to vector<1x256xi32>
    %c-1_i32 = arith.constant -1 : i32
    %59 = vector.broadcast %c-1_i32 : i32 to vector<1x256xi32>
    %60 = arith.select %54, %58, %59 : vector<1x256xi1>, vector<1x256xi32>
    %61 = arith.fptosi %34 : vector<1x256xf32> to vector<1x256xi32>
    %62 = tpu.iota {dimensions = array<i32: 0>} : vector<256x256xi32>
    %63 = vector.broadcast %60 : vector<1x256xi32> to vector<256x256xi32>
    %64 = arith.cmpi eq, %62, %63 : vector<256x256xi32>
    %65 = arith.extui %64 : vector<256x256xi1> to vector<256x256xi32>
    %66 = arith.sitofp %65 : vector<256x256xi32> to vector<256x256xf32>
    %67 = arith.truncf %66 : vector<256x256xf32> to vector<256x256xbf16>
    %68 = tpu.iota {dimensions = array<i32: 0>} : vector<8x256xi32>
    %69 = vector.broadcast %61 : vector<1x256xi32> to vector<8x256xi32>
    %70 = arith.cmpi eq, %68, %69 : vector<8x256xi32>
    %71 = arith.extui %70 : vector<8x256xi1> to vector<8x256xi32>
    %72 = arith.sitofp %71 : vector<8x256xi32> to vector<8x256xf32>
    %73 = tpu.transpose %72, [1, 0] : vector<8x256xf32> -> vector<256x8xf32>
    %74 = arith.truncf %73 : vector<256x8xf32> to vector<256x8xbf16>
    %cst_19 = arith.constant dense<0.000000e+00> : vector<256x8xf32>
    %75 = tpu.matmul %67, %74, %cst_19 {dimension_numbers = #tpu.dot_dimension_numbers<[1], [0], [0], [1], [0, 0, 1, 1], [], []>} : vector<256x256xbf16>, vector<256x8xbf16>, vector<256x8xf32> -> vector<256x8xf32>
    %c0_20 = arith.constant 0 : index
    %c0_21 = arith.constant 0 : index
    %76 = vector.load %arg5[%c0_20, %c0_21] : memref<256x8xf32, #tpu.memory_space<vmem>>, vector<256x8xf32>
    %77 = arith.addf %76, %75 : vector<256x8xf32>
    %c0_22 = arith.constant 0 : index
    %c0_23 = arith.constant 0 : index
    %78 = vector.load %arg5[%c0_22, %c0_23] : memref<256x8xf32, #tpu.memory_space<vmem>>, vector<256x8xf32>
    tpu.vector_store %arg5[%c0_22, %c0_23], %77 {strides = array<i32>} : memref<256x8xf32, #tpu.memory_space<vmem>>, vector<256x8xf32>,
    %c0_i32_24 = arith.constant 0 : i32
    %79 = arith.cmpi eq, %arg2, %c0_i32_24 : i32
    %80 = arith.extui %79 : i1 to i32
    %c0_i32_25 = arith.constant 0 : i32
    %81 = arith.cmpi ne, %80, %c0_i32_25 : i32
    scf.if %81 {
      %c0_26 = arith.constant 0 : index
      %c0_27 = arith.constant 0 : index
      %82 = vector.load %arg5[%c0_26, %c0_27] : memref<256x8xf32, #tpu.memory_space<vmem>>, vector<256x8xf32>
      %cst_28 = arith.constant 0.000000e+00 : f32
      %83 = vector.broadcast %cst_28 : f32 to vector<256x8xf32>
      %84 = arith.cmpf ogt, %82, %83 : vector<256x8xf32>
      %85 = arith.extui %84 : vector<256x8xi1> to vector<256x8xi32>
      %86 = arith.sitofp %85 : vector<256x8xi32> to vector<256x8xf32>
      %87 = tpu.transpose %86, [1, 0] : vector<256x8xf32> -> vector<8x256xf32>
      %88 = vector.extract_strided_slice %87 {offsets = [0, 0], sizes = [4, 256], strides = [1, 1]} : vector<8x256xf32> to vector<4x256xf32>
      %c0_29 = arith.constant 0 : index
      %c0_30 = arith.constant 0 : index
      %c0_31 = arith.constant 0 : index
      %c0_32 = arith.constant 0 : index
      %89 = vector.load %arg4[%c0_29, %c0_30, %c0_31, %c0_32] : memref<1x1x4x256xf32, #tpu.memory_space<vmem>>, vector<1x1x4x256xf32>
      %90 = vector.shape_cast %89 : vector<1x1x4x256xf32> to vector<4x256xf32>
      %91 = vector.shape_cast %88 : vector<4x256xf32> to vector<1x1x4x256xf32>
      tpu.vector_store %arg4[%c0_29, %c0_30, %c0_31, %c0_32], %91 {strides = array<i32>} : memref<1x1x4x256xf32, #tpu.memory_space<vmem>>, vector<1x1x4x256xf32>,
    } else {
    }
    return
  }
  func.func @transform_0(%arg0: i32, %arg1: i32, %arg2: i32) -> (i32, i32, i32) {
    %c1_i32 = arith.constant 1 : i32
    %0 = arith.muli %arg1, %c1_i32 : i32
    %1 = arith.addi %0, %arg2 : i32
    %c0_i32 = arith.constant 0 : i32
    %c0_i32_0 = arith.constant 0 : i32
    return %arg0, %c0_i32, %1 : i32, i32, i32
  }
  func.func @transform_1(%arg0: i32, %arg1: i32, %arg2: i32) -> (i32, i32, i32, i32) {
    %c0_i32 = arith.constant 0 : i32
    %c0_i32_0 = arith.constant 0 : i32
    %c0_i32_1 = arith.constant 0 : i32
    return %arg0, %arg1, %c0_i32, %c0_i32_0 : i32, i32, i32, i32
  }
}

</mosaic_0001>

<llo_original>
// kernel: tpu_custom_call.1
$region0: #{tpu_custom_call.1}
  #allocation0 [shape = 'u32[]', space=smem, size = 0x4, offset = 0x4, fixed_abs, tag = 'smem constant byte address 0x4 - core index']
  #allocation1 [shape = 'u32[72,128]{1,0:T(1,128)}', space=vmem, size = 0x9000, scoped, tag = 'internal scratch']
  #allocation2 [shape = 'f32[256,8]{1,0:T(8,128)}', space=vmem, size = 0x20000, scoped, tag = 'scratch operand']
  %s0 = inlined_call_operand.vmem [shape: f32[2,3,256], index: 0, kind: input, shape index: {}]
  %s1 = inlined_call_operand.hbm [shape: f32[2,1,4,256], index: 1, kind: output, shape index: {}]
  %s2 = sld [smem:[#allocation0]]
  $region45: #{tpu_custom_call.1} parent=0
    _
  %s4 = ssub.s32 1, %s2
  %s5 = scalar_select 0, %s4, %s2
  $region1: #{tpu_custom_call.1} parent=0
    #allocation3 [shape = 'u8[8192]{0}', space=vmem, size = 0x2000, scoped, tag = 'output window, operand 0']
    #allocation4 [shape = 's32[2]{0}', space=sflag, size = 0x8, scoped, tag = 'scoped memory for tpu_custom_call.1']
    %6 = vsyncpa [#allocation4], 0
    %s7 = scalar_lea.sflag [#allocation4], 1
    %8 = vsyncpa %s7, 0
    loop: start=0, step=1, limit=4
    $region2: #{tpu_custom_call.1} parent=1 // loop_pre_header
      _
    $region3: #{tpu_custom_call.1} parent=1 // loop_header
      %s10 = sphi 0, %s14
      %p11 = scmp.ge.s32.totalorder %s10, 4
      %s17 = sphi 0, %s36
      %s18 = sphi 0, %s32
      %s19 = sphi 0, %s28
      %s20 = sphi 0, %s17
      %s21 = sphi 0, %s18
      %s22 = sphi 0, %s19
      %s23 = sphi 0, %s20
      %s24 = sphi 0, %s21
      %s25 = sphi 0, %s22
      %s43 = sphi 0, %s45
      %s46 = sphi 0, %s43
      %s47 = sphi 0, %s46
      %s63 = sphi 0, %s47
      %s71 = sphi 0, %s73
      %s74 = sphi 0, %s71
      %s75 = sphi 0, %s74
      %s91 = sphi 0, %s75
    $region4: #{tpu_custom_call.1} parent=1 // loop_header_branch
      %13 = sbr.rel (%p11) target = $region8
    $region5: #{tpu_custom_call.1} parent=1 // loop_body
      %s15 = ssub.s32 %s10, 1
      %s16 = ssub.s32 %s10, 2
      %s26 = sadd.s32 1, %s19
      %p27 = scmp.ge.s32.totalorder %s26, 1
      %s28 = scalar_select %p27, 0, %s26
      %s29 = sadd.s32 1, %s18
      %s30 = scalar_select %p27, %s29, %s18
      %p31 = scmp.ge.s32.totalorder %s30, 1
      %s32 = scalar_select %p31, 0, %s30
      %s33 = sadd.s32 1, %s17
      %s34 = scalar_select %p31, %s33, %s17
      %p35 = scmp.ge.s32.totalorder %s34, 2
      %s36 = scalar_select %p35, 0, %s34
      %s37 = sadd.s32 %s18, %s19
      %s38 = sadd.s32 %s32, %s28
      %s39 = ssub.s32 %s17, %s36
      %s40 = ssub.s32 %s37, %s38
      %s41 = sor.u32 %s39, %s40
      %p42 = scmp.eq.s32.totalorder %s41, 0
      %s44 = sadd.s32 %s43, 1
      %s45 = scalar_select %p42, %s43, %s44
      %p48 = pneg %p42
      %p49 = scmp.eq.s32.totalorder %s10, 1
      %p50 = por %p48, %p49
      %p51 = scmp.ne.s32.totalorder %s43, %s46
      %p52 = scmp.eq.s32.totalorder %s10, 0
      %p53 = por %p51, %p52
      %p54 = scmp.ne.s32.totalorder %s43, %s46
      %p55 = scmp.eq.s32.totalorder %s15, 1
      %p56 = por %p54, %p55
      %p57 = scmp.ne.s32.totalorder %s46, %s47
      %p58 = scmp.eq.s32.totalorder %s15, 0
      %p59 = por %p57, %p58
      %p60 = scmp.ne.s32.totalorder %s46, %s47
      %p61 = scmp.eq.s32.totalorder %s16, 1
      %p62 = por %p60, %p61
      %p64 = scmp.ne.s32.totalorder %s47, %s63
      %p65 = scmp.eq.s32.totalorder %s16, 0
      %p66 = por %p64, %p65
      %s67 = ssub.s32 %s17, %s36
      %s68 = ssub.s32 %s18, %s32
      %s69 = sor.u32 %s67, %s68
      %p70 = scmp.eq.s32.totalorder %s69, 0
      %s72 = sadd.s32 %s71, 1
      %s73 = scalar_select %p70, %s71, %s72
      %p76 = pneg %p70
      %p77 = scmp.eq.s32.totalorder %s10, 1
      %p78 = por %p76, %p77
      %p79 = scmp.ne.s32.totalorder %s71, %s74
      %p80 = scmp.eq.s32.totalorder %s10, 0
      %p81 = por %p79, %p80
      %p82 = scmp.ne.s32.totalorder %s71, %s74
      %p83 = scmp.eq.s32.totalorder %s15, 1
      %p84 = por %p82, %p83
      %p85 = scmp.ne.s32.totalorder %s74, %s75
      %p86 = scmp.eq.s32.totalorder %s15, 0
      %p87 = por %p85, %p86
      %p88 = scmp.ne.s32.totalorder %s74, %s75
      %p89 = scmp.eq.s32.totalorder %s16, 1
      %p90 = por %p88, %p89
      %p92 = scmp.ne.s32.totalorder %s75, %s91
      %p93 = scmp.eq.s32.totalorder %s16, 0
      %p94 = por %p92, %p93
      %p95 = scmp.le.s32.totalorder 1, %s10
      %p96 = scmp.lt.s32.totalorder %s10, 3
      %p97 = pnand %p95, %p96
      %p98 = pneg %p97
      // Predicated region
      $region9: #{tpu_custom_call.1} parent=5 // pred_check
        _
      $region10: #{tpu_custom_call.1} parent=5 // pred_check_branch
        %100 = sbr.rel (%p97) target = $region12
      $region11: #{tpu_custom_call.1} parent=5 // pred_region
        %s101 = ssub.s32 %s10, 1
      $region12: #{tpu_custom_call.1} parent=5 // pred_fallthru
        _
      %p102 = scmp.lt.s32.totalorder %s10, 2
      // Predicated region
      $region13: #{tpu_custom_call.1} parent=5 // pred_check
        %p103 = pneg %p102
      $region14: #{tpu_custom_call.1} parent=5 // pred_check_branch
        %105 = sbr.rel (%p103) target = $region16
      $region15: #{tpu_custom_call.1} parent=5 // pred_region
        // Predicated region
        $region17: #{tpu_custom_call.1} parent=15 // pred_check
          %p106 = pneg %p53
        $region18: #{tpu_custom_call.1} parent=15 // pred_check_branch
          %108 = sbr.rel (%p106) target = $region20
        $region19: #{tpu_custom_call.1} parent=15 // pred_region
          %s109 = sadd.s32 %s18, %s19
          %s110 = smul.u32 2, %s109
          %p111 = scmp.lt.s32.totalorder %s17, 1
          %s112 = scalar_select %p111, %s17, 1
          %p113 = scmp.lt.s32.totalorder %s110, 1
          %s114 = scalar_select %p113, %s110, 1
          %s115 = smul.addr %s112, 2
          %s116 = sadd.s32 %s114, %s115
          %s117 = smul.addr %s116, 4
          %s118 = scalar_lea.vmem %s0, %s117
          %s119 = sadd.s32 %s18, %s19
          %s120 = smul.u32 2, %s119
        $region20: #{tpu_custom_call.1} parent=15 // pred_fallthru
          _
      $region16: #{tpu_custom_call.1} parent=5 // pred_fallthru
        _
      %p121 = scmp.le.s32.totalorder 1, %s10
      %p122 = scmp.lt.s32.totalorder %s10, 3
      %p123 = pnand %p121, %p122
      %p124 = pneg %p123
      // Predicated region
      $region21: #{tpu_custom_call.1} parent=5 // pred_check
        _
      $region22: #{tpu_custom_call.1} parent=5 // pred_check_branch
        %126 = sbr.rel (%p123) target = $region24
      $region23: #{tpu_custom_call.1} parent=5 // pred_region
        %s127 = ssub.s32 %s10, 1
        %s128 = sadd.s32 %s21, %s22
        %s129 = smul.u32 2, %s128
        %p130 = scmp.lt.s32.totalorder %s20, 1
        %s131 = scalar_select %p130, %s20, 1
        %p132 = scmp.lt.s32.totalorder %s129, 1
        %s133 = scalar_select %p132, %s129, 1
        %s134 = smul.addr %s131, 2
        %s135 = sadd.s32 %s133, %s134
        %s136 = smul.addr %s135, 4
        %s137 = scalar_lea.vmem %s0, %s136
        %p138 = pneg %p59
        %p139 = pneg %p56
        %p140 = pneg %p87
        %p141 = pneg %p84
        %s142 = sand.u32 %s74, 1
        %s143 = scalar_lea.sflag [#allocation4], %s142
        %s144 = sand.u32 %s74, 1
        %s145 = smul.addr %s144, 8
        %s146 = scalar_lea.vmem [#allocation3], %s145
        %s147 = sadd.s32 %s21, %s22
        %s148 = smul.u32 2, %s147
        %p149 = scmp.lt.s32.totalorder %s20, 1
        %s150 = scalar_select %p149, %s20, 1
        %p151 = scmp.lt.s32.totalorder %s148, 1
        %s152 = scalar_select %p151, %s148, 1
        %s153 = smul.addr %s150, 2
        %s154 = sadd.s32 %s152, %s153
        %s155 = smul.addr %s154, 4
        %s156 = scalar_lea.vmem %s0, %s155
        %s157 = sadd.s32 %s21, %s22
        %s158 = smul.u32 2, %s157
        %p159 = scmp.eq.s32.totalorder %s22, 0
        // Predicated region
        $region25: #{tpu_custom_call.1} parent=23 // pred_check
          %p160 = pneg %p159
        $region26: #{tpu_custom_call.1} parent=23 // pred_check_branch
          %162 = sbr.rel (%p160) target = $region28
        $region27: #{tpu_custom_call.1} parent=23 // pred_region
          %vm163 = vcmask 64512
          %164 = vst.msk [vmem:[#allocation2] sm:$0xff] %vm163, 0.0
          %165 = vst.msk [vmem:[#allocation2 + $0x8] sm:$0xff] %vm163, 0.0
          %166 = vst.msk [vmem:[#allocation2 + $0x10] sm:$0xff] %vm163, 0.0
          %167 = vst.msk [vmem:[#allocation2 + $0x18] sm:$0xff] %vm163, 0.0
          %168 = vst.msk [vmem:[#allocation2 + $0x20] sm:$0xff] %vm163, 0.0
          %169 = vst.msk [vmem:[#allocation2 + $0x28] sm:$0xff] %vm163, 0.0
          %170 = vst.msk [vmem:[#allocation2 + $0x30] sm:$0xff] %vm163, 0.0
          %171 = vst.msk [vmem:[#allocation2 + $0x38] sm:$0xff] %vm163, 0.0
          %172 = vst.msk [vmem:[#allocation2 + $0x40] sm:$0xff] %vm163, 0.0
          %173 = vst.msk [vmem:[#allocation2 + $0x48] sm:$0xff] %vm163, 0.0
          %174 = vst.msk [vmem:[#allocation2 + $0x50] sm:$0xff] %vm163, 0.0
          %175 = vst.msk [vmem:[#allocation2 + $0x58] sm:$0xff] %vm163, 0.0
          %176 = vst.msk [vmem:[#allocation2 + $0x60] sm:$0xff] %vm163, 0.0
          %177 = vst.msk [vmem:[#allocation2 + $0x68] sm:$0xff] %vm163, 0.0
          %178 = vst.msk [vmem:[#allocation2 + $0x70] sm:$0xff] %vm163, 0.0
          %179 = vst.msk [vmem:[#allocation2 + $0x78] sm:$0xff] %vm163, 0.0
          %180 = vst.msk [vmem:[#allocation2 + $0x80] sm:$0xff] %vm163, 0.0
          %181 = vst.msk [vmem:[#allocation2 + $0x88] sm:$0xff] %vm163, 0.0
          %182 = vst.msk [vmem:[#allocation2 + $0x90] sm:$0xff] %vm163, 0.0
          %183 = vst.msk [vmem:[#allocation2 + $0x98] sm:$0xff] %vm163, 0.0
          %184 = vst.msk [vmem:[#allocation2 + $0xa0] sm:$0xff] %vm163, 0.0
          %185 = vst.msk [vmem:[#allocation2 + $0xa8] sm:$0xff] %vm163, 0.0
          %186 = vst.msk [vmem:[#allocation2 + $0xb0] sm:$0xff] %vm163, 0.0
          %187 = vst.msk [vmem:[#allocation2 + $0xb8] sm:$0xff] %vm163, 0.0
          %188 = vst.msk [vmem:[#allocation2 + $0xc0] sm:$0xff] %vm163, 0.0
          %189 = vst.msk [vmem:[#allocation2 + $0xc8] sm:$0xff] %vm163, 0.0
          %190 = vst.msk [vmem:[#allocation2 + $0xd0] sm:$0xff] %vm163, 0.0
          %191 = vst.msk [vmem:[#allocation2 + $0xd8] sm:$0xff] %vm163, 0.0
          %192 = vst.msk [vmem:[#allocation2 + $0xe0] sm:$0xff] %vm163, 0.0
          %193 = vst.msk [vmem:[#allocation2 + $0xe8] sm:$0xff] %vm163, 0.0
          %194 = vst.msk [vmem:[#allocation2 + $0xf0] sm:$0xff] %vm163, 0.0
          %195 = vst.msk [vmem:[#allocation2 + $0xf8] sm:$0xff] %vm163, 0.0
        $region28: #{tpu_custom_call.1} parent=23 // pred_fallthru
          _
        %v196 = vld [vmem:[%s156] sm:$0x77]
        %v197 = vrcp.pop 0.5
        %v198 = vmul.f32 0.5, %v197
        %v199 = vsub.f32 1.0, %v198
        %v200 = vmul.f32 %v197, %v199
        %v201 = vadd.f32 %v197, %v200
        %vm202 = vweird.f32 %v197
        %v203 = vsel %vm202, %v197, %v201
        %v204 = vmul.f32 %v196, %v203
        %v205 = vfloor.f32 %v204
        %v206 = vmax.f32 %v205, 0.0
        %v207 = vmin.f32 %v206, 15.0
        %v208 = vsub.f32 4.0, %v196
        %v209 = vmul.f32 %v208, %v203
        %v210 = vfloor.f32 %v209
        %v211 = vmax.f32 %v210, 0.0
        %v212 = vmin.f32 %v211, 15.0
        %v213 = vmin.f32 %v206, 3.0
        %vm214 = vcmp.ge.f32.partialorder %v196, 0.0
        %vm215 = vcmp.le.f32.partialorder %v196, 8.0
        %vm216 = vmand %vm214, %vm215
        %vm217 = vcmp.ge.f32.partialorder %v196, -4.0
        %v218 = vsel %vm217, 1, 0
        %v219 = vrot.slane %v218, 5
        %v220 = vrot.slane %v219, 4
        %vm221 = vcmp.ne.s32.totalorder %v220, 0
        %vm222 = vmand %vm216, %vm221
        %vm223 = vcmp.le.f32.partialorder %v196, 4.0
        %v224 = vsel %vm223, 1, 0
        %v225 = vrot.slane %v224, 5
        %v226 = vrot.slane %v225, 4
        %vm227 = vcmp.ne.s32.totalorder %v226, 0
        %vm228 = vmand %vm222, %vm227
        %s229 = sadd.s32 %s21, %s22
        %s230 = smul.u32 %s229, 256
        %v231 = vlaneseq
        %v232 = vand.u32 %v231, 127
        %v233 = vadd.s32 %v232, 128
        %v234 = vstv %s230
        %v235 = vadd.s32 %v234, %v232
        %v236 = vadd.s32 %v234, %v233
        %vm237 = vcmp.lt.s32.totalorder %v235, 200
        %vm238 = vcmp.lt.s32.totalorder %v236, 200
        %v239 = vsel %vm237, 1, 0
        %v240 = vsel %vm238, 1, 0
        %v241 = vrot.slane %v240, 4
        %vm242 = vcmask 1043456
        %v243 = vsel %vm242, %v239, %v241
        %vm244 = vcmp.ne.s32.totalorder %v243, 0
        %vm245 = vmand %vm228, %vm244
        %v246 = vmul.f32 %v212, 16.0
        %v248 = vrot.slane %v207, 7
        %v250 = vadd.f32 %v246, %v248
        %v251 = vcvt.f32.s32.to.zero.pseudo %v250
        %v252 = vrot.slane %v251, 5
        %v253 = vrot.slane %v252, 4
        %v254 = vsel %vm245, %v253, 4294967295
        %v255 = vcvt.f32.s32.to.zero.pseudo %v213
        %v256 = vlaneseq
        %v257 = vshrl.u32 %v256, 7
        %v258 = vadd.s32 %v257, 8
        %v259 = vadd.s32 %v257, 16
        %v260 = vadd.s32 %v257, 24
        %v261 = vadd.s32 %v257, 32
        %v262 = vadd.s32 %v257, 40
        %v263 = vadd.s32 %v257, 48
        %v264 = vadd.s32 %v257, 56
        %v265 = vadd.s32 %v257, 64
        %v266 = vadd.s32 %v257, 72
        %v267 = vadd.s32 %v257, 80
        %v268 = vadd.s32 %v257, 88
        %v269 = vadd.s32 %v257, 96
        %v270 = vadd.s32 %v257, 104
        %v271 = vadd.s32 %v257, 112
        %v272 = vadd.s32 %v257, 120
        %v273 = vadd.s32 %v257, 128
        %v274 = vadd.s32 %v257, 136
        %v275 = vadd.s32 %v257, 144
        %v276 = vadd.s32 %v257, 152
        %v277 = vadd.s32 %v257, 160
        %v278 = vadd.s32 %v257, 168
        %v279 = vadd.s32 %v257, 176
        %v280 = vadd.s32 %v257, 184
        %v281 = vadd.s32 %v257, 192
        %v282 = vadd.s32 %v257, 200
        %v283 = vadd.s32 %v257, 208
        %v284 = vadd.s32 %v257, 216
        %v285 = vadd.s32 %v257, 224
        %v286 = vadd.s32 %v257, 232
        %v287 = vadd.s32 %v257, 240
        %v288 = vadd.s32 %v257, 248
        %v289 = vperm.slane %v254, 0
        %v290 = vperm.slane %v254, 4
        %v291 = vperm.slane %v289, 0
        %v292 = vperm.slane %v290, 0
        %vm293 = vcmp.eq.s32.totalorder %v257, %v291
        %vm294 = vcmp.eq.s32.totalorder %v257, %v292
        %vm295 = vcmp.eq.s32.totalorder %v258, %v291
        %vm296 = vcmp.eq.s32.totalorder %v258, %v292
        %vm297 = vcmp.eq.s32.totalorder %v259, %v291
        %vm298 = vcmp.eq.s32.totalorder %v259, %v292
        %vm299 = vcmp.eq.s32.totalorder %v260, %v291
        %vm300 = vcmp.eq.s32.totalorder %v260, %v292
        %vm301 = vcmp.eq.s32.totalorder %v261, %v291
        %vm302 = vcmp.eq.s32.totalorder %v261, %v292
        %vm303 = vcmp.eq.s32.totalorder %v262, %v291
        %vm304 = vcmp.eq.s32.totalorder %v262, %v292
        %vm305 = vcmp.eq.s32.totalorder %v263, %v291
        %vm306 = vcmp.eq.s32.totalorder %v263, %v292
        %vm307 = vcmp.eq.s32.totalorder %v264, %v291
        %vm308 = vcmp.eq.s32.totalorder %v264, %v292
        %vm309 = vcmp.eq.s32.totalorder %v265, %v291
        %vm310 = vcmp.eq.s32.totalorder %v265, %v292
        %vm311 = vcmp.eq.s32.totalorder %v266, %v291
        %vm312 = vcmp.eq.s32.totalorder %v266, %v292
        %vm313 = vcmp.eq.s32.totalorder %v267, %v291
        %vm314 = vcmp.eq.s32.totalorder %v267, %v292
        %vm315 = vcmp.eq.s32.totalorder %v268, %v291
        %vm316 = vcmp.eq.s32.totalorder %v268, %v292
        %vm317 = vcmp.eq.s32.totalorder %v269, %v291
        %vm318 = vcmp.eq.s32.totalorder %v269, %v292
        %vm319 = vcmp.eq.s32.totalorder %v270, %v291
        %vm320 = vcmp.eq.s32.totalorder %v270, %v292
        %vm321 = vcmp.eq.s32.totalorder %v271, %v291
        %vm322 = vcmp.eq.s32.totalorder %v271, %v292
        %vm323 = vcmp.eq.s32.totalorder %v272, %v291
        %vm324 = vcmp.eq.s32.totalorder %v272, %v292
        %vm325 = vcmp.eq.s32.totalorder %v273, %v291
        %vm326 = vcmp.eq.s32.totalorder %v273, %v292
        %vm327 = vcmp.eq.s32.totalorder %v274, %v291
        %vm328 = vcmp.eq.s32.totalorder %v274, %v292
        %vm329 = vcmp.eq.s32.totalorder %v275, %v291
        %vm330 = vcmp.eq.s32.totalorder %v275, %v292
        %vm331 = vcmp.eq.s32.totalorder %v276, %v291
        %vm332 = vcmp.eq.s32.totalorder %v276, %v292
        %vm333 = vcmp.eq.s32.totalorder %v277, %v291
        %vm334 = vcmp.eq.s32.totalorder %v277, %v292
        %vm335 = vcmp.eq.s32.totalorder %v278, %v291
        %vm336 = vcmp.eq.s32.totalorder %v278, %v292
        %vm337 = vcmp.eq.s32.totalorder %v279, %v291
        %vm338 = vcmp.eq.s32.totalorder %v279, %v292
        %vm339 = vcmp.eq.s32.totalorder %v280, %v291
        %vm340 = vcmp.eq.s32.totalorder %v280, %v292
        %vm341 = vcmp.eq.s32.totalorder %v281, %v291
        %vm342 = vcmp.eq.s32.totalorder %v281, %v292
        %vm343 = vcmp.eq.s32.totalorder %v282, %v291
        %vm344 = vcmp.eq.s32.totalorder %v282, %v292
        %vm345 = vcmp.eq.s32.totalorder %v283, %v291
        %vm346 = vcmp.eq.s32.totalorder %v283, %v292
        %vm347 = vcmp.eq.s32.totalorder %v284, %v291
        %vm348 = vcmp.eq.s32.totalorder %v284, %v292
        %vm349 = vcmp.eq.s32.totalorder %v285, %v291
        %vm350 = vcmp.eq.s32.totalorder %v285, %v292
        %vm351 = vcmp.eq.s32.totalorder %v286, %v291
        %vm352 = vcmp.eq.s32.totalorder %v286, %v292
        %vm353 = vcmp.eq.s32.totalorder %v287, %v291
        %vm354 = vcmp.eq.s32.totalorder %v287, %v292
        %vm355 = vcmp.eq.s32.totalorder %v288, %v291
        %vm356 = vcmp.eq.s32.totalorder %v288, %v292
        %v357 = vsel %vm293, 1, 0
        %v358 = vsel %vm294, 1, 0
        %v359 = vsel %vm295, 1, 0
        %v360 = vsel %vm296, 1, 0
        %v361 = vsel %vm297, 1, 0
        %v362 = vsel %vm298, 1, 0
        %v363 = vsel %vm299, 1, 0
        %v364 = vsel %vm300, 1, 0
        %v365 = vsel %vm301, 1, 0
        %v366 = vsel %vm302, 1, 0
        %v367 = vsel %vm303, 1, 0
        %v368 = vsel %vm304, 1, 0
        %v369 = vsel %vm305, 1, 0
        %v370 = vsel %vm306, 1, 0
        %v371 = vsel %vm307, 1, 0
        %v372 = vsel %vm308, 1, 0
        %v373 = vsel %vm309, 1, 0
        %v374 = vsel %vm310, 1, 0
        %v375 = vsel %vm311, 1, 0
        %v376 = vsel %vm312, 1, 0
        %v377 = vsel %vm313, 1, 0
        %v378 = vsel %vm314, 1, 0
        %v379 = vsel %vm315, 1, 0
        %v380 = vsel %vm316, 1, 0
        %v381 = vsel %vm317, 1, 0
        %v382 = vsel %vm318, 1, 0
        %v383 = vsel %vm319, 1, 0
        %v384 = vsel %vm320, 1, 0
        %v385 = vsel %vm321, 1, 0
        %v386 = vsel %vm322, 1, 0
        %v387 = vsel %vm323, 1, 0
        %v388 = vsel %vm324, 1, 0
        %v389 = vsel %vm325, 1, 0
        %v390 = vsel %vm326, 1, 0
        %v391 = vsel %vm327, 1, 0
        %v392 = vsel %vm328, 1, 0
        %v393 = vsel %vm329, 1, 0
        %v394 = vsel %vm330, 1, 0
        %v395 = vsel %vm331, 1, 0
        %v396 = vsel %vm332, 1, 0
        %v397 = vsel %vm333, 1, 0
        %v398 = vsel %vm334, 1, 0
        %v399 = vsel %vm335, 1, 0
        %v400 = vsel %vm336, 1, 0
        %v401 = vsel %vm337, 1, 0
        %v402 = vsel %vm338, 1, 0
        %v403 = vsel %vm339, 1, 0
        %v404 = vsel %vm340, 1, 0
        %v405 = vsel %vm341, 1, 0
        %v406 = vsel %vm342, 1, 0
        %v407 = vsel %vm343, 1, 0
        %v408 = vsel %vm344, 1, 0
        %v409 = vsel %vm345, 1, 0
        %v410 = vsel %vm346, 1, 0
        %v411 = vsel %vm347, 1, 0
        %v412 = vsel %vm348, 1, 0
        %v413 = vsel %vm349, 1, 0
        %v414 = vsel %vm350, 1, 0
        %v415 = vsel %vm351, 1, 0
        %v416 = vsel %vm352, 1, 0
        %v417 = vsel %vm353, 1, 0
        %v418 = vsel %vm354, 1, 0
        %v419 = vsel %vm355, 1, 0
        %v420 = vsel %vm356, 1, 0
        %v421 = vcvt.s32.f32 %v357
        %v422 = vcvt.s32.f32 %v358
        %v423 = vcvt.s32.f32 %v359
        %v424 = vcvt.s32.f32 %v360
        %v425 = vcvt.s32.f32 %v361
        %v426 = vcvt.s32.f32 %v362
        %v427 = vcvt.s32.f32 %v363
        %v428 = vcvt.s32.f32 %v364
        %v429 = vcvt.s32.f32 %v365
        %v430 = vcvt.s32.f32 %v366
        %v431 = vcvt.s32.f32 %v367
        %v432 = vcvt.s32.f32 %v368
        %v433 = vcvt.s32.f32 %v369
        %v434 = vcvt.s32.f32 %v370
        %v435 = vcvt.s32.f32 %v371
        %v436 = vcvt.s32.f32 %v372
        %v437 = vcvt.s32.f32 %v373
        %v438 = vcvt.s32.f32 %v374
        %v439 = vcvt.s32.f32 %v375
        %v440 = vcvt.s32.f32 %v376
        %v441 = vcvt.s32.f32 %v377
        %v442 = vcvt.s32.f32 %v378
        %v443 = vcvt.s32.f32 %v379
        %v444 = vcvt.s32.f32 %v380
        %v445 = vcvt.s32.f32 %v381
        %v446 = vcvt.s32.f32 %v382
        %v447 = vcvt.s32.f32 %v383
        %v448 = vcvt.s32.f32 %v384
        %v449 = vcvt.s32.f32 %v385
        %v450 = vcvt.s32.f32 %v386
        %v451 = vcvt.s32.f32 %v387
        %v452 = vcvt.s32.f32 %v388
        %v453 = vcvt.s32.f32 %v389
        %v454 = vcvt.s32.f32 %v390
        %v455 = vcvt.s32.f32 %v391
        %v456 = vcvt.s32.f32 %v392
        %v457 = vcvt.s32.f32 %v393
        %v458 = vcvt.s32.f32 %v394
        %v459 = vcvt.s32.f32 %v395
        %v460 = vcvt.s32.f32 %v396
        %v461 = vcvt.s32.f32 %v397
        %v462 = vcvt.s32.f32 %v398
        %v463 = vcvt.s32.f32 %v399
        %v464 = vcvt.s32.f32 %v400
        %v465 = vcvt.s32.f32 %v401
        %v466 = vcvt.s32.f32 %v402
        %v467 = vcvt.s32.f32 %v403
        %v468 = vcvt.s32.f32 %v404
        %v469 = vcvt.s32.f32 %v405
        %v470 = vcvt.s32.f32 %v406
        %v471 = vcvt.s32.f32 %v407
        %v472 = vcvt.s32.f32 %v408
        %v473 = vcvt.s32.f32 %v409
        %v474 = vcvt.s32.f32 %v410
        %v475 = vcvt.s32.f32 %v411
        %v476 = vcvt.s32.f32 %v412
        %v477 = vcvt.s32.f32 %v413
        %v478 = vcvt.s32.f32 %v414
        %v479 = vcvt.s32.f32 %v415
        %v480 = vcvt.s32.f32 %v416
        %v481 = vcvt.s32.f32 %v417
        %v482 = vcvt.s32.f32 %v418
        %v483 = vcvt.s32.f32 %v419
        %v484 = vcvt.s32.f32 %v420
        %v485 = vpack.c.bf16 %v423, %v421
        %v486 = vpack.c.bf16 %v424, %v422
        %v487 = vpack.c.bf16 %v427, %v425
        %v488 = vpack.c.bf16 %v428, %v426
        %v489 = vpack.c.bf16 %v431, %v429
        %v490 = vpack.c.bf16 %v432, %v430
        %v491 = vpack.c.bf16 %v435, %v433
        %v492 = vpack.c.bf16 %v436, %v434
        %v493 = vpack.c.bf16 %v439, %v437
        %v494 = vpack.c.bf16 %v440, %v438
        %v495 = vpack.c.bf16 %v443, %v441
        %v496 = vpack.c.bf16 %v444, %v442
        %v497 = vpack.c.bf16 %v447, %v445
        %v498 = vpack.c.bf16 %v448, %v446
        %v499 = vpack.c.bf16 %v451, %v449
        %v500 = vpack.c.bf16 %v452, %v450
        %v501 = vpack.c.bf16 %v455, %v453
        %v502 = vpack.c.bf16 %v456, %v454
        %v503 = vpack.c.bf16 %v459, %v457
        %v504 = vpack.c.bf16 %v460, %v458
        %v505 = vpack.c.bf16 %v463, %v461
        %v506 = vpack.c.bf16 %v464, %v462
        %v507 = vpack.c.bf16 %v467, %v465
        %v508 = vpack.c.bf16 %v468, %v466
        %v509 = vpack.c.bf16 %v471, %v469
        %v510 = vpack.c.bf16 %v472, %v470
        %v511 = vpack.c.bf16 %v475, %v473
        %v512 = vpack.c.bf16 %v476, %v474
        %v513 = vpack.c.bf16 %v479, %v477
        %v514 = vpack.c.bf16 %v480, %v478
        %v515 = vpack.c.bf16 %v483, %v481
        %v516 = vpack.c.bf16 %v484, %v482
        %v517 = vperm.slane %v255, 2
        %v518 = vperm.slane %v255, 6
        %v519 = vperm.slane %v517, 2
        %v520 = vperm.slane %v518, 2
        %vm521 = vcmp.eq.s32.totalorder %v257, %v519
        %vm522 = vcmp.eq.s32.totalorder %v257, %v520
        %v523 = vsel %vm521, 1, 0
        %v524 = vsel %vm522, 1, 0
        %v525 = vcvt.s32.f32 %v523
        %v526 = vcvt.s32.f32 %v524
        %527 = vxpose.xlu0.b32.start [1/16] %v525, 128
        %528 = vxpose.xlu0.b32.cont [2/16] 0.0, 128
        %529 = vxpose.xlu0.b32.cont [3/16] 0.0, 128
        %530 = vxpose.xlu0.b32.cont [4/16] 0.0, 128
        %531 = vxpose.xlu0.b32.cont [5/16] 0.0, 128
        %532 = vxpose.xlu0.b32.cont [6/16] 0.0, 128
        %533 = vxpose.xlu0.b32.cont [7/16] 0.0, 128
        %534 = vxpose.xlu0.b32.cont [8/16] 0.0, 128
        %535 = vxpose.xlu0.b32.cont [9/16] 0.0, 128
        %536 = vxpose.xlu0.b32.cont [10/16] 0.0, 128
        %537 = vxpose.xlu0.b32.cont [11/16] 0.0, 128
        %538 = vxpose.xlu0.b32.cont [12/16] 0.0, 128
        %539 = vxpose.xlu0.b32.cont [13/16] 0.0, 128
        %540 = vxpose.xlu0.b32.cont [14/16] 0.0, 128
        %541 = vxpose.xlu0.b32.cont [15/16] 0.0, 128
        %542 = vxpose.xlu0.b32.end [16/16] 0.0, 128
        %v543 = vpop.trf.xlu0
        %v544 = vpop.trf.xlu0
        %v545 = vpop.trf.xlu0
        %v546 = vpop.trf.xlu0
        %v547 = vpop.trf.xlu0
        %v548 = vpop.trf.xlu0
        %v549 = vpop.trf.xlu0
        %v550 = vpop.trf.xlu0
        %v551 = vpop.trf.xlu0
        %v552 = vpop.trf.xlu0
        %v553 = vpop.trf.xlu0
        %v554 = vpop.trf.xlu0
        %v555 = vpop.trf.xlu0
        %v556 = vpop.trf.xlu0
        %v557 = vpop.trf.xlu0
        %v558 = vpop.trf.xlu0
        %559 = vxpose.xlu0.b32.start [1/16] %v526, 128
        %560 = vxpose.xlu0.b32.cont [2/16] 0.0, 128
        %561 = vxpose.xlu0.b32.cont [3/16] 0.0, 128
        %562 = vxpose.xlu0.b32.cont [4/16] 0.0, 128
        %563 = vxpose.xlu0.b32.cont [5/16] 0.0, 128
        %564 = vxpose.xlu0.b32.cont [6/16] 0.0, 128
        %565 = vxpose.xlu0.b32.cont [7/16] 0.0, 128
        %566 = vxpose.xlu0.b32.cont [8/16] 0.0, 128
        %567 = vxpose.xlu0.b32.cont [9/16] 0.0, 128
        %568 = vxpose.xlu0.b32.cont [10/16] 0.0, 128
        %569 = vxpose.xlu0.b32.cont [11/16] 0.0, 128
        %570 = vxpose.xlu0.b32.cont [12/16] 0.0, 128
        %571 = vxpose.xlu0.b32.cont [13/16] 0.0, 128
        %572 = vxpose.xlu0.b32.cont [14/16] 0.0, 128
        %573 = vxpose.xlu0.b32.cont [15/16] 0.0, 128
        %574 = vxpose.xlu0.b32.end [16/16] 0.0, 128
        %v575 = vpop.trf.xlu0
        %v576 = vpop.trf.xlu0
        %v577 = vpop.trf.xlu0
        %v578 = vpop.trf.xlu0
        %v579 = vpop.trf.xlu0
        %v580 = vpop.trf.xlu0
        %v581 = vpop.trf.xlu0
        %v582 = vpop.trf.xlu0
        %v583 = vpop.trf.xlu0
        %v584 = vpop.trf.xlu0
        %v585 = vpop.trf.xlu0
        %v586 = vpop.trf.xlu0
        %v587 = vpop.trf.xlu0
        %v588 = vpop.trf.xlu0
        %v589 = vpop.trf.xlu0
        %v590 = vpop.trf.xlu0
        %v591 = vpack.c.bf16 %v544, %v543
        %v592 = vpack.c.bf16 %v546, %v545
        %v593 = vpack.c.bf16 %v548, %v547
        %v594 = vpack.c.bf16 %v550, %v549
        %v595 = vpack.c.bf16 %v552, %v551
        %v596 = vpack.c.bf16 %v554, %v553
        %v597 = vpack.c.bf16 %v556, %v555
        %v598 = vpack.c.bf16 %v558, %v557
        %v599 = vpack.c.bf16 %v576, %v575
        %v600 = vpack.c.bf16 %v578, %v577
        %v601 = vpack.c.bf16 %v580, %v579
        %v602 = vpack.c.bf16 %v582, %v581
        %v603 = vpack.c.bf16 %v584, %v583
        %v604 = vpack.c.bf16 %v586, %v585
        %v605 = vpack.c.bf16 %v588, %v587
        %v606 = vpack.c.bf16 %v590, %v589
        %607 = vmatpush.bf16.msra.mxu0 %v598
        %608 = vmatpush.bf16.msra.mxu0 %v597
        %609 = vmatpush.bf16.msra.mxu0 %v596
        %610 = vmatpush.bf16.msra.mxu0 %v595
        %611 = vmatpush.bf16.msra.mxu0 %v594
        %612 = vmatpush.bf16.msra.mxu0 %v593
        %613 = vmatpush.bf16.msra.mxu0 %v592
        %614 = vmatpush.bf16.msra.mxu0 %v591
        %615 = vmatmul.bf16.gmra.mxu0 %v485
        %v616 = vpop.f32.mrf.mxu0
        %v617 = vadd.f32 0.0, %v616
        %v618 = vpop.f32.mrf.mxu0
        %v619 = vadd.f32 0.0, %v618
        %620 = vmatmul.bf16.gmra.mxu0 %v487
        %v621 = vpop.f32.mrf.mxu0
        %v622 = vadd.f32 0.0, %v621
        %v623 = vpop.f32.mrf.mxu0
        %v624 = vadd.f32 0.0, %v623
        %625 = vmatmul.bf16.gmra.mxu0 %v489
        %v626 = vpop.f32.mrf.mxu0
        %v627 = vadd.f32 0.0, %v626
        %v628 = vpop.f32.mrf.mxu0
        %v629 = vadd.f32 0.0, %v628
        %630 = vmatmul.bf16.gmra.mxu0 %v491
        %v631 = vpop.f32.mrf.mxu0
        %v632 = vadd.f32 0.0, %v631
        %v633 = vpop.f32.mrf.mxu0
        %v634 = vadd.f32 0.0, %v633
        %635 = vmatmul.bf16.gmra.mxu0 %v493
        %v636 = vpop.f32.mrf.mxu0
        %v637 = vadd.f32 0.0, %v636
        %v638 = vpop.f32.mrf.mxu0
        %v639 = vadd.f32 0.0, %v638
        %640 = vmatmul.bf16.gmra.mxu0 %v495
        %v641 = vpop.f32.mrf.mxu0
        %v642 = vadd.f32 0.0, %v641
        %v643 = vpop.f32.mrf.mxu0
        %v644 = vadd.f32 0.0, %v643
        %645 = vmatmul.bf16.gmra.mxu0 %v497
        %v646 = vpop.f32.mrf.mxu0
        %v647 = vadd.f32 0.0, %v646
        %v648 = vpop.f32.mrf.mxu0
        %v649 = vadd.f32 0.0, %v648
        %650 = vmatmul.bf16.gmra.mxu0 %v499
        %v651 = vpop.f32.mrf.mxu0
        %v652 = vadd.f32 0.0, %v651
        %v653 = vpop.f32.mrf.mxu0
        %v654 = vadd.f32 0.0, %v653
        %655 = vmatmul.bf16.gmra.mxu0 %v501
        %v656 = vpop.f32.mrf.mxu0
        %v657 = vadd.f32 0.0, %v656
        %v658 = vpop.f32.mrf.mxu0
        %v659 = vadd.f32 0.0, %v658
        %660 = vmatmul.bf16.gmra.mxu0 %v503
        %v661 = vpop.f32.mrf.mxu0
        %v662 = vadd.f32 0.0, %v661
        %v663 = vpop.f32.mrf.mxu0
        %v664 = vadd.f32 0.0, %v663
        %665 = vmatmul.bf16.gmra.mxu0 %v505
        %v666 = vpop.f32.mrf.mxu0
        %v667 = vadd.f32 0.0, %v666
        %v668 = vpop.f32.mrf.mxu0
        %v669 = vadd.f32 0.0, %v668
        %670 = vmatmul.bf16.gmra.mxu0 %v507
        %v671 = vpop.f32.mrf.mxu0
        %v672 = vadd.f32 0.0, %v671
        %v673 = vpop.f32.mrf.mxu0
        %v674 = vadd.f32 0.0, %v673
        %675 = vmatmul.bf16.gmra.mxu0 %v509
        %v676 = vpop.f32.mrf.mxu0
        %v677 = vadd.f32 0.0, %v676
        %v678 = vpop.f32.mrf.mxu0
        %v679 = vadd.f32 0.0, %v678
        %680 = vmatmul.bf16.gmra.mxu0 %v511
        %v681 = vpop.f32.mrf.mxu0
        %v682 = vadd.f32 0.0, %v681
        %v683 = vpop.f32.mrf.mxu0
        %v684 = vadd.f32 0.0, %v683
        %685 = vmatmul.bf16.gmra.mxu0 %v513
        %v686 = vpop.f32.mrf.mxu0
        %v687 = vadd.f32 0.0, %v686
        %v688 = vpop.f32.mrf.mxu0
        %v689 = vadd.f32 0.0, %v688
        %690 = vmatmul.bf16.gmra.mxu0 %v515
        %v691 = vpop.f32.mrf.mxu0
        %v692 = vadd.f32 0.0, %v691
        %v693 = vpop.f32.mrf.mxu0
        %v694 = vadd.f32 0.0, %v693
        %695 = vdwg.mxu0
        %696 = vmatpush.bf16.msra.mxu0 %v606
        %697 = vmatpush.bf16.msra.mxu0 %v605
        %698 = vmatpush.bf16.msra.mxu0 %v604
        %699 = vmatpush.bf16.msra.mxu0 %v603
        %700 = vmatpush.bf16.msra.mxu0 %v602
        %701 = vmatpush.bf16.msra.mxu0 %v601
        %702 = vmatpush.bf16.msra.mxu0 %v600
        %703 = vmatpush.bf16.msra.mxu0 %v599
        %704 = vmatmul.bf16.gmra.mxu0 %v486
        %v705 = vpop.f32.mrf.mxu0
        %v706 = vadd.f32 %v617, %v705
        %v707 = vpop.f32.mrf.mxu0
        %v708 = vadd.f32 %v619, %v707
        %709 = vmatmul.bf16.gmra.mxu0 %v488
        %v710 = vpop.f32.mrf.mxu0
        %v711 = vadd.f32 %v622, %v710
        %v712 = vpop.f32.mrf.mxu0
        %v713 = vadd.f32 %v624, %v712
        %714 = vmatmul.bf16.gmra.mxu0 %v490
        %v715 = vpop.f32.mrf.mxu0
        %v716 = vadd.f32 %v627, %v715
        %v717 = vpop.f32.mrf.mxu0
        %v718 = vadd.f32 %v629, %v717
        %719 = vmatmul.bf16.gmra.mxu0 %v492
        %v720 = vpop.f32.mrf.mxu0
        %v721 = vadd.f32 %v632, %v720
        %v722 = vpop.f32.mrf.mxu0
        %v723 = vadd.f32 %v634, %v722
        %724 = vmatmul.bf16.gmra.mxu0 %v494
        %v725 = vpop.f32.mrf.mxu0
        %v726 = vadd.f32 %v637, %v725
        %v727 = vpop.f32.mrf.mxu0
        %v728 = vadd.f32 %v639, %v727
        %729 = vmatmul.bf16.gmra.mxu0 %v496
        %v730 = vpop.f32.mrf.mxu0
        %v731 = vadd.f32 %v642, %v730
        %v732 = vpop.f32.mrf.mxu0
        %v733 = vadd.f32 %v644, %v732
        %734 = vmatmul.bf16.gmra.mxu0 %v498
        %v735 = vpop.f32.mrf.mxu0
        %v736 = vadd.f32 %v647, %v735
        %v737 = vpop.f32.mrf.mxu0
        %v738 = vadd.f32 %v649, %v737
        %739 = vmatmul.bf16.gmra.mxu0 %v500
        %v740 = vpop.f32.mrf.mxu0
        %v741 = vadd.f32 %v652, %v740
        %v742 = vpop.f32.mrf.mxu0
        %v743 = vadd.f32 %v654, %v742
        %744 = vmatmul.bf16.gmra.mxu0 %v502
        %v745 = vpop.f32.mrf.mxu0
        %v746 = vadd.f32 %v657, %v745
        %v747 = vpop.f32.mrf.mxu0
        %v748 = vadd.f32 %v659, %v747
        %749 = vmatmul.bf16.gmra.mxu0 %v504
        %v750 = vpop.f32.mrf.mxu0
        %v751 = vadd.f32 %v662, %v750
        %v752 = vpop.f32.mrf.mxu0
        %v753 = vadd.f32 %v664, %v752
        %754 = vmatmul.bf16.gmra.mxu0 %v506
        %v755 = vpop.f32.mrf.mxu0
        %v756 = vadd.f32 %v667, %v755
        %v757 = vpop.f32.mrf.mxu0
        %v758 = vadd.f32 %v669, %v757
        %759 = vmatmul.bf16.gmra.mxu0 %v508
        %v760 = vpop.f32.mrf.mxu0
        %v761 = vadd.f32 %v672, %v760
        %v762 = vpop.f32.mrf.mxu0
        %v763 = vadd.f32 %v674, %v762
        %764 = vmatmul.bf16.gmra.mxu0 %v510
        %v765 = vpop.f32.mrf.mxu0
        %v766 = vadd.f32 %v677, %v765
        %v767 = vpop.f32.mrf.mxu0
        %v768 = vadd.f32 %v679, %v767
        %769 = vmatmul.bf16.gmra.mxu0 %v512
        %v770 = vpop.f32.mrf.mxu0
        %v771 = vadd.f32 %v682, %v770
        %v772 = vpop.f32.mrf.mxu0
        %v773 = vadd.f32 %v684, %v772
        %774 = vmatmul.bf16.gmra.mxu0 %v514
        %v775 = vpop.f32.mrf.mxu0
        %v776 = vadd.f32 %v687, %v775
        %v777 = vpop.f32.mrf.mxu0
        %v778 = vadd.f32 %v689, %v777
        %779 = vmatmul.bf16.gmra.mxu0 %v516
        %v780 = vpop.f32.mrf.mxu0
        %v781 = vadd.f32 %v692, %v780
        %v782 = vpop.f32.mrf.mxu0
        %v783 = vadd.f32 %v694, %v782
        %784 = vdwg.mxu0
        %v785 = vld [vmem:[#allocation2] sm:$0xff]
        %v786 = vld [vmem:[#allocation2 + $0x8] sm:$0xff]
        %v787 = vld [vmem:[#allocation2 + $0x10] sm:$0xff]
        %v788 = vld [vmem:[#allocation2 + $0x18] sm:$0xff]
        %v789 = vld [vmem:[#allocation2 + $0x20] sm:$0xff]
        %v790 = vld [vmem:[#allocation2 + $0x28] sm:$0xff]
        %v791 = vld [vmem:[#allocation2 + $0x30] sm:$0xff]
        %v792 = vld [vmem:[#allocation2 + $0x38] sm:$0xff]
        %v793 = vld [vmem:[#allocation2 + $0x40] sm:$0xff]
        %v794 = vld [vmem:[#allocation2 + $0x48] sm:$0xff]
        %v795 = vld [vmem:[#allocation2 + $0x50] sm:$0xff]
        %v796 = vld [vmem:[#allocation2 + $0x58] sm:$0xff]
        %v797 = vld [vmem:[#allocation2 + $0x60] sm:$0xff]
        %v798 = vld [vmem:[#allocation2 + $0x68] sm:$0xff]
        %v799 = vld [vmem:[#allocation2 + $0x70] sm:$0xff]
        %v800 = vld [vmem:[#allocation2 + $0x78] sm:$0xff]
        %v801 = vld [vmem:[#allocation2 + $0x80] sm:$0xff]
        %v802 = vld [vmem:[#allocation2 + $0x88] sm:$0xff]
        %v803 = vld [vmem:[#allocation2 + $0x90] sm:$0xff]
        %v804 = vld [vmem:[#allocation2 + $0x98] sm:$0xff]
        %v805 = vld [vmem:[#allocation2 + $0xa0] sm:$0xff]
        %v806 = vld [vmem:[#allocation2 + $0xa8] sm:$0xff]
        %v807 = vld [vmem:[#allocation2 + $0xb0] sm:$0xff]
        %v808 = vld [vmem:[#allocation2 + $0xb8] sm:$0xff]
        %v809 = vld [vmem:[#allocation2 + $0xc0] sm:$0xff]
        %v810 = vld [vmem:[#allocation2 + $0xc8] sm:$0xff]
        %v811 = vld [vmem:[#allocation2 + $0xd0] sm:$0xff]
        %v812 = vld [vmem:[#allocation2 + $0xd8] sm:$0xff]
        %v813 = vld [vmem:[#allocation2 + $0xe0] sm:$0xff]
        %v814 = vld [vmem:[#allocation2 + $0xe8] sm:$0xff]
        %v815 = vld [vmem:[#allocation2 + $0xf0] sm:$0xff]
        %v816 = vld [vmem:[#allocation2 + $0xf8] sm:$0xff]
        %v817 = vadd.f32 %v785, %v706
        %v818 = vadd.f32 %v786, %v708
        %v819 = vadd.f32 %v787, %v711
        %v820 = vadd.f32 %v788, %v713
        %v821 = vadd.f32 %v789, %v716
        %v822 = vadd.f32 %v790, %v718
        %v823 = vadd.f32 %v791, %v721
        %v824 = vadd.f32 %v792, %v723
        %v825 = vadd.f32 %v793, %v726
        %v826 = vadd.f32 %v794, %v728
        %v827 = vadd.f32 %v795, %v731
        %v828 = vadd.f32 %v796, %v733
        %v829 = vadd.f32 %v797, %v736
        %v830 = vadd.f32 %v798, %v738
        %v831 = vadd.f32 %v799, %v741
        %v832 = vadd.f32 %v800, %v743
        %v833 = vadd.f32 %v801, %v746
        %v834 = vadd.f32 %v802, %v748
        %v835 = vadd.f32 %v803, %v751
        %v836 = vadd.f32 %v804, %v753
        %v837 = vadd.f32 %v805, %v756
        %v838 = vadd.f32 %v806, %v758
        %v839 = vadd.f32 %v807, %v761
        %v840 = vadd.f32 %v808, %v763
        %v841 = vadd.f32 %v809, %v766
        %v842 = vadd.f32 %v810, %v768
        %v843 = vadd.f32 %v811, %v771
        %v844 = vadd.f32 %v812, %v773
        %v845 = vadd.f32 %v813, %v776
        %v846 = vadd.f32 %v814, %v778
        %v847 = vadd.f32 %v815, %v781
        %v848 = vadd.f32 %v816, %v783
        %vm849 = vcmask 64512
        %850 = vst.msk [vmem:[#allocation2] sm:$0xff] %vm849, %v817
        %851 = vst.msk [vmem:[#allocation2 + $0x8] sm:$0xff] %vm849, %v818
        %852 = vst.msk [vmem:[#allocation2 + $0x10] sm:$0xff] %vm849, %v819
        %853 = vst.msk [vmem:[#allocation2 + $0x18] sm:$0xff] %vm849, %v820
        %854 = vst.msk [vmem:[#allocation2 + $0x20] sm:$0xff] %vm849, %v821
        %855 = vst.msk [vmem:[#allocation2 + $0x28] sm:$0xff] %vm849, %v822
        %856 = vst.msk [vmem:[#allocation2 + $0x30] sm:$0xff] %vm849, %v823
        %857 = vst.msk [vmem:[#allocation2 + $0x38] sm:$0xff] %vm849, %v824
        %858 = vst.msk [vmem:[#allocation2 + $0x40] sm:$0xff] %vm849, %v825
        %859 = vst.msk [vmem:[#allocation2 + $0x48] sm:$0xff] %vm849, %v826
        %860 = vst.msk [vmem:[#allocation2 + $0x50] sm:$0xff] %vm849, %v827
        %861 = vst.msk [vmem:[#allocation2 + $0x58] sm:$0xff] %vm849, %v828
        %862 = vst.msk [vmem:[#allocation2 + $0x60] sm:$0xff] %vm849, %v829
        %863 = vst.msk [vmem:[#allocation2 + $0x68] sm:$0xff] %vm849, %v830
        %864 = vst.msk [vmem:[#allocation2 + $0x70] sm:$0xff] %vm849, %v831
        %865 = vst.msk [vmem:[#allocation2 + $0x78] sm:$0xff] %vm849, %v832
        %866 = vst.msk [vmem:[#allocation2 + $0x80] sm:$0xff] %vm849, %v833
        %867 = vst.msk [vmem:[#allocation2 + $0x88] sm:$0xff] %vm849, %v834
        %868 = vst.msk [vmem:[#allocation2 + $0x90] sm:$0xff] %vm849, %v835
        %869 = vst.msk [vmem:[#allocation2 + $0x98] sm:$0xff] %vm849, %v836
        %870 = vst.msk [vmem:[#allocation2 + $0xa0] sm:$0xff] %vm849, %v837
        %871 = vst.msk [vmem:[#allocation2 + $0xa8] sm:$0xff] %vm849, %v838
        %872 = vst.msk [vmem:[#allocation2 + $0xb0] sm:$0xff] %vm849, %v839
        %873 = vst.msk [vmem:[#allocation2 + $0xb8] sm:$0xff] %vm849, %v840
        %874 = vst.msk [vmem:[#allocation2 + $0xc0] sm:$0xff] %vm849, %v841
        %875 = vst.msk [vmem:[#allocation2 + $0xc8] sm:$0xff] %vm849, %v842
        %876 = vst.msk [vmem:[#allocation2 + $0xd0] sm:$0xff] %vm849, %v843
        %877 = vst.msk [vmem:[#allocation2 + $0xd8] sm:$0xff] %vm849, %v844
        %878 = vst.msk [vmem:[#allocation2 + $0xe0] sm:$0xff] %vm849, %v845
        %879 = vst.msk [vmem:[#allocation2 + $0xe8] sm:$0xff] %vm849, %v846
        %880 = vst.msk [vmem:[#allocation2 + $0xf0] sm:$0xff] %vm849, %v847
        %881 = vst.msk [vmem:[#allocation2 + $0xf8] sm:$0xff] %vm849, %v848
        // Predicated region
        $region29: #{tpu_custom_call.1} parent=23 // pred_check
          %p882 = pneg %p159
        $region30: #{tpu_custom_call.1} parent=23 // pred_check_branch
          %884 = sbr.rel (%p882) target = $region32
        $region31: #{tpu_custom_call.1} parent=23 // pred_region
          %v885 = vld [vmem:[#allocation2] sm:$0xff]
          %v886 = vld [vmem:[#allocation2 + $0x8] sm:$0xff]
          %v887 = vld [vmem:[#allocation2 + $0x10] sm:$0xff]
          %v888 = vld [vmem:[#allocation2 + $0x18] sm:$0xff]
          %v889 = vld [vmem:[#allocation2 + $0x20] sm:$0xff]
          %v890 = vld [vmem:[#allocation2 + $0x28] sm:$0xff]
          %v891 = vld [vmem:[#allocation2 + $0x30] sm:$0xff]
          %v892 = vld [vmem:[#allocation2 + $0x38] sm:$0xff]
          %v893 = vld [vmem:[#allocation2 + $0x40] sm:$0xff]
          %v894 = vld [vmem:[#allocation2 + $0x48] sm:$0xff]
          %v895 = vld [vmem:[#allocation2 + $0x50] sm:$0xff]
          %v896 = vld [vmem:[#allocation2 + $0x58] sm:$0xff]
          %v897 = vld [vmem:[#allocation2 + $0x60] sm:$0xff]
          %v898 = vld [vmem:[#allocation2 + $0x68] sm:$0xff]
          %v899 = vld [vmem:[#allocation2 + $0x70] sm:$0xff]
          %v900 = vld [vmem:[#allocation2 + $0x78] sm:$0xff]
          %v901 = vld [vmem:[#allocation2 + $0x80] sm:$0xff]
          %v902 = vld [vmem:[#allocation2 + $0x88] sm:$0xff]
          %v903 = vld [vmem:[#allocation2 + $0x90] sm:$0xff]
          %v904 = vld [vmem:[#allocation2 + $0x98] sm:$0xff]
          %v905 = vld [vmem:[#allocation2 + $0xa0] sm:$0xff]
          %v906 = vld [vmem:[#allocation2 + $0xa8] sm:$0xff]
          %v907 = vld [vmem:[#allocation2 + $0xb0] sm:$0xff]
          %v908 = vld [vmem:[#allocation2 + $0xb8] sm:$0xff]
          %v909 = vld [vmem:[#allocation2 + $0xc0] sm:$0xff]
          %v910 = vld [vmem:[#allocation2 + $0xc8] sm:$0xff]
          %v911 = vld [vmem:[#allocation2 + $0xd0] sm:$0xff]
          %v912 = vld [vmem:[#allocation2 + $0xd8] sm:$0xff]
          %v913 = vld [vmem:[#allocation2 + $0xe0] sm:$0xff]
          %v914 = vld [vmem:[#allocation2 + $0xe8] sm:$0xff]
          %v915 = vld [vmem:[#allocation2 + $0xf0] sm:$0xff]
          %v916 = vld [vmem:[#allocation2 + $0xf8] sm:$0xff]
          %vm917 = vcmp.gt.f32.partialorder %v885, 0.0
          %vm918 = vcmp.gt.f32.partialorder %v886, 0.0
          %vm919 = vcmp.gt.f32.partialorder %v887, 0.0
          %vm920 = vcmp.gt.f32.partialorder %v888, 0.0
          %vm921 = vcmp.gt.f32.partialorder %v889, 0.0
          %vm922 = vcmp.gt.f32.partialorder %v890, 0.0
          %vm923 = vcmp.gt.f32.partialorder %v891, 0.0
          %vm924 = vcmp.gt.f32.partialorder %v892, 0.0
          %vm925 = vcmp.gt.f32.partialorder %v893, 0.0
          %vm926 = vcmp.gt.f32.partialorder %v894, 0.0
          %vm927 = vcmp.gt.f32.partialorder %v895, 0.0
          %vm928 = vcmp.gt.f32.partialorder %v896, 0.0
          %vm929 = vcmp.gt.f32.partialorder %v897, 0.0
          %vm930 = vcmp.gt.f32.partialorder %v898, 0.0
          %vm931 = vcmp.gt.f32.partialorder %v899, 0.0
          %vm932 = vcmp.gt.f32.partialorder %v900, 0.0
          %vm933 = vcmp.gt.f32.partialorder %v901, 0.0
          %vm934 = vcmp.gt.f32.partialorder %v902, 0.0
          %vm935 = vcmp.gt.f32.partialorder %v903, 0.0
          %vm936 = vcmp.gt.f32.partialorder %v904, 0.0
          %vm937 = vcmp.gt.f32.partialorder %v905, 0.0
          %vm938 = vcmp.gt.f32.partialorder %v906, 0.0
          %vm939 = vcmp.gt.f32.partialorder %v907, 0.0
          %vm940 = vcmp.gt.f32.partialorder %v908, 0.0
          %vm941 = vcmp.gt.f32.partialorder %v909, 0.0
          %vm942 = vcmp.gt.f32.partialorder %v910, 0.0
          %vm943 = vcmp.gt.f32.partialorder %v911, 0.0
          %vm944 = vcmp.gt.f32.partialorder %v912, 0.0
          %vm945 = vcmp.gt.f32.partialorder %v913, 0.0
          %vm946 = vcmp.gt.f32.partialorder %v914, 0.0
          %vm947 = vcmp.gt.f32.partialorder %v915, 0.0
          %vm948 = vcmp.gt.f32.partialorder %v916, 0.0
          %v949 = vsel %vm917, 1, 0
          %v950 = vsel %vm918, 1, 0
          %v951 = vsel %vm919, 1, 0
          %v952 = vsel %vm920, 1, 0
          %v953 = vsel %vm921, 1, 0
          %v954 = vsel %vm922, 1, 0
          %v955 = vsel %vm923, 1, 0
          %v956 = vsel %vm924, 1, 0
          %v957 = vsel %vm925, 1, 0
          %v958 = vsel %vm926, 1, 0
          %v959 = vsel %vm927, 1, 0
          %v960 = vsel %vm928, 1, 0
          %v961 = vsel %vm929, 1, 0
          %v962 = vsel %vm930, 1, 0
          %v963 = vsel %vm931, 1, 0
          %v964 = vsel %vm932, 1, 0
          %v965 = vsel %vm933, 1, 0
          %v966 = vsel %vm934, 1, 0
          %v967 = vsel %vm935, 1, 0
          %v968 = vsel %vm936, 1, 0
          %v969 = vsel %vm937, 1, 0
          %v970 = vsel %vm938, 1, 0
          %v971 = vsel %vm939, 1, 0
          %v972 = vsel %vm940, 1, 0
          %v973 = vsel %vm941, 1, 0
          %v974 = vsel %vm942, 1, 0
          %v975 = vsel %vm943, 1, 0
          %v976 = vsel %vm944, 1, 0
          %v977 = vsel %vm945, 1, 0
          %v978 = vsel %vm946, 1, 0
          %v979 = vsel %vm947, 1, 0
          %v980 = vsel %vm948, 1, 0
          %v981 = vcvt.s32.f32 %v949
          %v982 = vcvt.s32.f32 %v950
          %v983 = vcvt.s32.f32 %v951
          %v984 = vcvt.s32.f32 %v952
          %v985 = vcvt.s32.f32 %v953
          %v986 = vcvt.s32.f32 %v954
          %v987 = vcvt.s32.f32 %v955
          %v988 = vcvt.s32.f32 %v956
          %v989 = vcvt.s32.f32 %v957
          %v990 = vcvt.s32.f32 %v958
          %v991 = vcvt.s32.f32 %v959
          %v992 = vcvt.s32.f32 %v960
          %v993 = vcvt.s32.f32 %v961
          %v994 = vcvt.s32.f32 %v962
          %v995 = vcvt.s32.f32 %v963
          %v996 = vcvt.s32.f32 %v964
          %v997 = vcvt.s32.f32 %v965
          %v998 = vcvt.s32.f32 %v966
          %v999 = vcvt.s32.f32 %v967
          %v1000 = vcvt.s32.f32 %v968
          %v1001 = vcvt.s32.f32 %v969
          %v1002 = vcvt.s32.f32 %v970
          %v1003 = vcvt.s32.f32 %v971
          %v1004 = vcvt.s32.f32 %v972
          %v1005 = vcvt.s32.f32 %v973
          %v1006 = vcvt.s32.f32 %v974
          %v1007 = vcvt.s32.f32 %v975
          %v1008 = vcvt.s32.f32 %v976
          %v1009 = vcvt.s32.f32 %v977
          %v1010 = vcvt.s32.f32 %v978
          %v1011 = vcvt.s32.f32 %v979
          %v1012 = vcvt.s32.f32 %v980
          %1013 = vxpose.xlu0.b32.start [1/16] %v981, 128
          %1014 = vxpose.xlu0.b32.cont [2/16] %v982, 128
          %1015 = vxpose.xlu0.b32.cont [3/16] %v983, 128
          %1016 = vxpose.xlu0.b32.cont [4/16] %v984, 128
          %1017 = vxpose.xlu0.b32.cont [5/16] %v985, 128
          %1018 = vxpose.xlu0.b32.cont [6/16] %v986, 128
          %1019 = vxpose.xlu0.b32.cont [7/16] %v987, 128
          %1020 = vxpose.xlu0.b32.cont [8/16] %v988, 128
          %1021 = vxpose.xlu0.b32.cont [9/16] %v989, 128
          %1022 = vxpose.xlu0.b32.cont [10/16] %v990, 128
          %1023 = vxpose.xlu0.b32.cont [11/16] %v991, 128
          %1024 = vxpose.xlu0.b32.cont [12/16] %v992, 128
          %1025 = vxpose.xlu0.b32.cont [13/16] %v993, 128
          %1026 = vxpose.xlu0.b32.cont [14/16] %v994, 128
          %1027 = vxpose.xlu0.b32.cont [15/16] %v995, 128
          %1028 = vxpose.xlu0.b32.end [16/16] %v996, 128
          %v1029 = vpop.trf.xlu0
          %v1030 = vpop.trf.xlu0
          %v1031 = vpop.trf.xlu0
          %v1032 = vpop.trf.xlu0
          %v1033 = vpop.trf.xlu0
          %v1034 = vpop.trf.xlu0
          %v1035 = vpop.trf.xlu0
          %v1036 = vpop.trf.xlu0
          %v1037 = vpop.trf.xlu0
          %v1038 = vpop.trf.xlu0
          %v1039 = vpop.trf.xlu0
          %v1040 = vpop.trf.xlu0
          %v1041 = vpop.trf.xlu0
          %v1042 = vpop.trf.xlu0
          %v1043 = vpop.trf.xlu0
          %v1044 = vpop.trf.xlu0
          %1045 = vxpose.xlu0.b32.start [1/16] %v997, 128
          %1046 = vxpose.xlu0.b32.cont [2/16] %v998, 128
          %1047 = vxpose.xlu0.b32.cont [3/16] %v999, 128
          %1048 = vxpose.xlu0.b32.cont [4/16] %v1000, 128
          %1049 = vxpose.xlu0.b32.cont [5/16] %v1001, 128
          %1050 = vxpose.xlu0.b32.cont [6/16] %v1002, 128
          %1051 = vxpose.xlu0.b32.cont [7/16] %v1003, 128
          %1052 = vxpose.xlu0.b32.cont [8/16] %v1004, 128
          %1053 = vxpose.xlu0.b32.cont [9/16] %v1005, 128
          %1054 = vxpose.xlu0.b32.cont [10/16] %v1006, 128
          %1055 = vxpose.xlu0.b32.cont [11/16] %v1007, 128
          %1056 = vxpose.xlu0.b32.cont [12/16] %v1008, 128
          %1057 = vxpose.xlu0.b32.cont [13/16] %v1009, 128
          %1058 = vxpose.xlu0.b32.cont [14/16] %v1010, 128
          %1059 = vxpose.xlu0.b32.cont [15/16] %v1011, 128
          %1060 = vxpose.xlu0.b32.end [16/16] %v1012, 128
          %v1061 = vpop.trf.xlu0
          %v1062 = vpop.trf.xlu0
          %v1063 = vpop.trf.xlu0
          %v1064 = vpop.trf.xlu0
          %v1065 = vpop.trf.xlu0
          %v1066 = vpop.trf.xlu0
          %v1067 = vpop.trf.xlu0
          %v1068 = vpop.trf.xlu0
          %v1069 = vpop.trf.xlu0
          %v1070 = vpop.trf.xlu0
          %v1071 = vpop.trf.xlu0
          %v1072 = vpop.trf.xlu0
          %v1073 = vpop.trf.xlu0
          %v1074 = vpop.trf.xlu0
          %v1075 = vpop.trf.xlu0
          %v1076 = vpop.trf.xlu0
          %v1079 = vrot.slane %v1061, 4
          %v1080 = vsel %vm242, %v1029, %v1079
          %1082 = vst [vmem:[%s146] sm:$0xff] %v1080
        $region32: #{tpu_custom_call.1} parent=23 // pred_fallthru
          _
        %s1083 = sand.u32 %s74, 1
        %s1084 = scalar_lea.sflag [#allocation4], %s1083
        %s1085 = sand.u32 %s74, 1
        %s1086 = smul.addr %s1085, 8
        %s1087 = scalar_lea.vmem [#allocation3], %s1086
        // Predicated region
        $region33: #{tpu_custom_call.1} parent=23 // pred_check
          %p1088 = pneg %p84
        $region34: #{tpu_custom_call.1} parent=23 // pred_check_branch
          %1090 = sbr.rel (%p1088) target = $region36
        $region35: #{tpu_custom_call.1} parent=23 // pred_region
          %1092 = vsyncadd %s1084, 0
          %s1093 = smul.addr %s21, 2
          %s1094 = smul.addr %s20, 2
          %s1095 = sadd.s32 %s1093, %s1094
          %s1096 = smul.addr %s1095, 4
          %s1097 = scalar_lea.hbm %s1, %s1096
          %s1099 = sshll.u32 %s1087, 4
          %s1100 = int_to_ptr.vmem [resolvable:$true] %s1099
          %s1101 = sshll.u32 %s1097, 4
          %s1102 = int_to_ptr.hbm [resolvable:$true] %s1101
          %1104 = dma.vmem_to_hbm [thread:$0]  %s1100, 128, %s1102, %s1084
        $region36: #{tpu_custom_call.1} parent=23 // pred_fallthru
          _
      $region24: #{tpu_custom_call.1} parent=5 // pred_fallthru
        _
      %p1105 = scmp.le.s32.totalorder 2, %s10
      // Predicated region
      $region37: #{tpu_custom_call.1} parent=5 // pred_check
        %p1106 = pneg %p1105
      $region38: #{tpu_custom_call.1} parent=5 // pred_check_branch
        %1108 = sbr.rel (%p1106) target = $region40
      $region39: #{tpu_custom_call.1} parent=5 // pred_region
        %s1109 = ssub.s32 %s10, 2
        // Predicated region
        $region41: #{tpu_custom_call.1} parent=39 // pred_check
          %p1110 = pneg %p90
        $region42: #{tpu_custom_call.1} parent=39 // pred_check_branch
          %1112 = sbr.rel (%p1110) target = $region44
        $region43: #{tpu_custom_call.1} parent=39 // pred_region
          %s1113 = sand.u32 %s75, 1
          %s1114 = scalar_lea.sflag [#allocation4], %s1113
          %s1115 = sand.u32 %s75, 1
          %s1116 = smul.addr %s1115, 8
          %s1117 = scalar_lea.vmem [#allocation3], %s1116
          %1119 = dma.done %s1114, 128
        $region44: #{tpu_custom_call.1} parent=39 // pred_fallthru
          _
      $region40: #{tpu_custom_call.1} parent=5 // pred_fallthru
        _
    $region6: #{tpu_custom_call.1} parent=1 // loop_footer
      %s14 = sadd.s32 1, %s10
    $region7: #{tpu_custom_call.1} parent=1 // loop_footer_branch
      %9 = sbr.rel target = $region3
    $region8: #{tpu_custom_call.1} parent=1 // loop_exit
      _
    %1120 = vsyncpa [#allocation4], 1
    %s1121 = scalar_lea.sflag [#allocation4], 1
    %1122 = vsyncpa %s1121, 1

</llo_original>
